<compile_context>
chip_gen: v5e
topology: v5e:2x2
jax: 0.10.0
libtpu: 0.0.40
codegen_flags: <defaults>
</compile_context>

<pallas_src>
import math

import jax
import jax.numpy as jnp
import numpy as np
from jax.experimental import pallas as pl
from jax.experimental.pallas import tpu as pltpu


# ----------------------------------------------------------------------------
# Kernel: one load-add-store.  x_ref: (Bt, Ct, HWt), pe_ref: (Ct, HWt).
# ----------------------------------------------------------------------------
def _pe2d_add_kernel(x_ref, pe_ref, o_ref):
    o_ref[...] = x_ref[...] + pe_ref[...]


# ----------------------------------------------------------------------------
# PE precompute (jnp, runs once per shape under jit; matches the PyTorch code).
# ----------------------------------------------------------------------------
def _positional_encoding_2d(C, H, W, dtype):
    d = C // 2
    div_term = jnp.exp(
        jnp.arange(0.0, d, 2, dtype=jnp.float32) * -(math.log(10000.0) / d)
    )                                                   # (d//2,)
    pos_w = jnp.arange(W, dtype=jnp.float32)[:, None]   # (W, 1)
    pos_h = jnp.arange(H, dtype=jnp.float32)[:, None]   # (H, 1)

    sw = jnp.sin(pos_w * div_term).T                    # (d//2, W)
    cw = jnp.cos(pos_w * div_term).T
    sh = jnp.sin(pos_h * div_term).T                    # (d//2, H)
    ch = jnp.cos(pos_h * div_term).T

    # channels 0..d-1: interleaved sin/cos varying along W, constant along H
    first = jnp.stack([sw, cw], axis=1).reshape(d, W)            # (d, W)
    first = jnp.broadcast_to(first[:, None, :], (d, H, W))
    # channels d..C-1: interleaved sin/cos varying along H, constant along W
    second = jnp.stack([sh, ch], axis=1).reshape(d, H)           # (d, H)
    second = jnp.broadcast_to(second[:, :, None], (d, H, W))

    pe = jnp.concatenate([first, second], axis=0)                # (C, H, W)
    return pe.astype(dtype)


# ----------------------------------------------------------------------------
# Generation-aware block budget & VMEM limit.
# ----------------------------------------------------------------------------
def _tpu_config():
    """Return (block_budget_bytes, vmem_limit_bytes)."""
    kind = ""
    try:
        kind = jax.devices()[0].device_kind.lower()
    except Exception:
        pass
    if ("v5e" in kind) or ("v5 lite" in kind) or ("v5lite" in kind):
        # v5e: ~0.82 TB/s HBM, 16 MiB default scoped VMEM. Small blocks are
        # already ~85% of roofline; keep worst-case 6x2 MiB well under limit.
        return 2 << 20, 32 << 20
    if ("v7" in kind) or ("7x" in kind):
        # v7x: ~3.2 TB/s HBM per TC, 64 MiB physical VMEM. Bigger blocks to
        # keep the fixed per-step overhead <10%; 6x8 MiB worst case < 56 MiB.
        return 8 << 20, 56 << 20
    # v6e-ish default (128 MiB physical VMEM, ~1.4 TB/s HBM).
    return 4 << 20, 48 << 20


# ----------------------------------------------------------------------------
# Tile selection: cdiv-friendly (non-divisor) tiles, TPU layout aware.
# ----------------------------------------------------------------------------
def _select_tiles(B, C, HW, itemsize, budget,
                  min_steps=8, min_block_bytes=256 << 10):
    # dtype-aware sublane packing: f32 -> 8 rows, bf16 -> 16, int8/fp8 -> 32.
    sub = {1: 32, 2: 16, 4: 8}.get(itemsize, 8)

    # Lane axis (flattened H*W): multiple of 128, or the full extent.
    c_min = C if C <= sub else sub
    if c_min * HW * itemsize <= budget or HW <= 128:
        tile_hw = HW
    else:
        tile_hw = max(128, (budget // (c_min * itemsize)) // 128 * 128)
        tile_hw = min(tile_hw, HW)

    # Channel axis: multiple of `sub`, or the full extent.
    if C * tile_hw * itemsize <= budget:
        tile_c = C
    else:
        tile_c = max(sub, (budget // (tile_hw * itemsize)) // sub * sub)
        tile_c = min(tile_c, C)

    # Batch axis: fold as many batch elements as still fit the budget.
    row_bytes = max(1, tile_c * tile_hw * itemsize)
    tile_b = int(max(1, min(B, budget // row_bytes)))

    # Enforce a minimum grid length (software pipelining + both v7x cores),
    # but never shrink c/hw blocks below min_block_bytes just to make steps.
    def steps(tb, tc, thw):
        return pl.cdiv(B, tb) * pl.cdiv(C, tc) * pl.cdiv(HW, thw)

    while steps(tile_b, tile_c, tile_hw) < min_steps:
        blk = tile_b * tile_c * tile_hw * itemsize
        if tile_b > 1:
            tile_b = max(1, tile_b // 2)
        elif tile_c > sub and tile_c // 2 >= sub and blk // 2 >= min_block_bytes:
            tile_c = max(sub, ((tile_c // 2) + sub - 1) // sub * sub)
        elif tile_hw > 128 and blk // 2 >= min_block_bytes:
            tile_hw = max(128, ((tile_hw // 2) + 127) // 128 * 128)
        else:
            break

    return tile_b, tile_c, tile_hw


# ----------------------------------------------------------------------------
# Public wrapper: returns x + positionalencoding2d(C, H, W)   (NCHW layout).
# ----------------------------------------------------------------------------
def positional_encoding_2d_add(x, *, donate_input=False):
    B, C, H, W = x.shape
    if C % 4 != 0:
        raise ValueError(
            "Cannot use sin/cos positional encoding with odd dimension "
            f"(got dim={C})")

    HW = H * W
    itemsize = jnp.dtype(x.dtype).itemsize

    # PE once, in x's dtype, lane-dense layout (C, H*W).
    pe = _positional_encoding_2d(C, H, W, x.dtype).reshape(C, HW)

    budget, vmem_limit = _tpu_config()
    tile_b, tile_c, tile_hw = _select_tiles(B, C, HW, itemsize, budget)

    # Batch is the INNERMOST (fastest) grid axis so the PE block index stays
    # constant across it and the PE tile is not re-DMA'd per batch step.
    grid = (pl.cdiv(C, tile_c), pl.cdiv(HW, tile_hw), pl.cdiv(B, tile_b))

    x2 = x.reshape(B, C, HW)

    kwargs = {}
    if donate_input:
        # Only beneficial when the caller actually donates x (jit donation);
        # otherwise XLA inserts a defensive copy, so it is off by default.
        kwargs["input_output_aliases"] = {0: 0}

    out = pl.pallas_call(
        _pe2d_add_kernel,
        out_shape=jax.ShapeDtypeStruct((B, C, HW), x.dtype),
        grid_spec=pltpu.PrefetchScalarGridSpec(
            num_scalar_prefetch=0,
            grid=grid,
            in_specs=[
                pl.BlockSpec((tile_b, tile_c, tile_hw),
                             lambda c, hw, b: (b, c, hw)),
                # PE block index ignores the (innermost) batch axis -> fetched
                # once per (c, hw) block, VMEM-resident across the batch loop.
                pl.BlockSpec((tile_c, tile_hw),
                             lambda c, hw, b: (c, hw)),
            ],
            out_specs=pl.BlockSpec((tile_b, tile_c, tile_hw),
                                   lambda c, hw, b: (b, c, hw)),
        ),
        compiler_params=pltpu.CompilerParams(
            dimension_semantics=("parallel", "parallel", "parallel"),
            vmem_limit_bytes=vmem_limit),
        cost_estimate=pl.CostEstimate(
            flops=B * C * HW,
            transcendentals=0,
            bytes_accessed=2 * B * C * HW * itemsize + C * HW * itemsize),
        **kwargs,
    )(x2, pe)

    return out.reshape(B, C, H, W)


# ----------------------------------------------------------------------------
# NumPy port of the PyTorch positionalencoding2d for verification.
# ----------------------------------------------------------------------------
def _pe2d_reference(C, H, W):
    d = C // 2
    div_term = np.exp(np.arange(0.0, d, 2) * -(math.log(10000.0) / d))
    pos_w = np.arange(0.0, W)[:, None]       # (W, 1)
    pos_h = np.arange(0.0, H)[:, None]       # (H, 1)
    pe = np.zeros((C, H, W), dtype=np.float32)
    sw = np.sin(pos_w * div_term).T          # (d/2, W)
    cw = np.cos(pos_w * div_term).T
    sh = np.sin(pos_h * div_term).T          # (d/2, H)
    ch = np.cos(pos_h * div_term).T
    pe[0:d:2, :, :] = np.repeat(sw[:, None, :], H, axis=1)
    pe[1:d:2, :, :] = np.repeat(cw[:, None, :], H, axis=1)
    pe[d::2, :, :] = np.repeat(sh[:, :, None], W, axis=2)
    pe[d + 1::2, :, :] = np.repeat(ch[:, :, None], W, axis=2)
    return pe


if __name__ == "__main__":
    B, C, H, W = 2, 8, 16, 16
    key = jax.random.PRNGKey(0)
    x = jax.random.normal(key, (B, C, H, W), dtype=jnp.float32)

    fn = jax.jit(positional_encoding_2d_add)
    out = jax.block_until_ready(fn(x))

    # Correctness check against the PyTorch-equivalent reference.
    ref = np.asarray(x) + _pe2d_reference(C, H, W)[None]
    np.testing.assert_allclose(np.asarray(out), ref, rtol=1e-5, atol=1e-5)

    print("KERNEL_OK")
</pallas_src>

<mosaic_0001>
module attributes {stable_mosaic.version = 11 : i64} {
  func.func @_pe2d_add_kernel(%arg0: i32, %arg1: i32, %arg2: i32, %arg3: memref<1x8x256xf32, #tpu.memory_space<vmem>>, %arg4: memref<8x256xf32, #tpu.memory_space<vmem>>, %arg5: memref<1x8x256xf32, #tpu.memory_space<vmem>>) attributes {dimension_semantics = [#tpu.dimension_semantics<parallel>, #tpu.dimension_semantics<parallel>, #tpu.dimension_semantics<parallel>], iteration_bounds = array<i64: 1, 1, 2>, scalar_prefetch = 0 : i64, scratch_operands = 0 : i64, tpu.core_type = #tpu.core_type<tc>, window_params = [{transform_indices = @transform_0, window_bounds = array<i64: 1, 8, 256>}, {transform_indices = @transform_1, window_bounds = array<i64: 8, 256>}, {transform_indices = @transform_2, window_bounds = array<i64: 1, 8, 256>}]} {
    %c0 = arith.constant 0 : index
    %c0_0 = arith.constant 0 : index
    %c0_1 = arith.constant 0 : index
    %0 = vector.load %arg3[%c0, %c0_0, %c0_1] : memref<1x8x256xf32, #tpu.memory_space<vmem>>, vector<1x8x256xf32>
    %c0_2 = arith.constant 0 : index
    %c0_3 = arith.constant 0 : index
    %1 = vector.load %arg4[%c0_2, %c0_3] : memref<8x256xf32, #tpu.memory_space<vmem>>, vector<8x256xf32>
    %2 = vector.shape_cast %1 : vector<8x256xf32> to vector<1x8x256xf32>
    %3 = arith.addf %0, %2 : vector<1x8x256xf32>
    %c0_4 = arith.constant 0 : index
    %c0_5 = arith.constant 0 : index
    %c0_6 = arith.constant 0 : index
    %4 = vector.load %arg5[%c0_4, %c0_5, %c0_6] : memref<1x8x256xf32, #tpu.memory_space<vmem>>, vector<1x8x256xf32>
    tpu.vector_store %arg5[%c0_4, %c0_5, %c0_6], %3 {strides = array<i32>} : memref<1x8x256xf32, #tpu.memory_space<vmem>>, vector<1x8x256xf32>,
    return
  }
  func.func @transform_0(%arg0: i32, %arg1: i32, %arg2: i32) -> (i32, i32, i32) {
    %c0_i32 = arith.constant 0 : i32
    return %arg2, %arg0, %arg1 : i32, i32, i32
  }
  func.func @transform_1(%arg0: i32, %arg1: i32, %arg2: i32) -> (i32, i32) {
    %c0_i32 = arith.constant 0 : i32
    return %arg0, %arg1 : i32, i32
  }
  func.func @transform_2(%arg0: i32, %arg1: i32, %arg2: i32) -> (i32, i32, i32) {
    %c0_i32 = arith.constant 0 : i32
    return %arg2, %arg0, %arg1 : i32, i32, i32
  }
}

</mosaic_0001>

<llo_original>
// kernel: positional_encoding_2d_add.1
$region0: #{positional_encoding_2d_add.1}
  #allocation0 [shape = 'u32[]', space=smem, size = 0x4, offset = 0x4, fixed_abs, tag = 'smem constant byte address 0x4 - core index']
  #allocation1 [shape = 'u32[72,128]{1,0:T(1,128)}', space=vmem, size = 0x9000, scoped, tag = 'internal scratch']
  %s0 = inlined_call_operand.vmem [shape: f32[2,8,256], index: 0, kind: input, shape index: {}]
  %s1 = inlined_call_operand.vmem [shape: f32[8,256], index: 1, kind: input, shape index: {}]
  %s2 = inlined_call_operand.vmem [shape: f32[2,8,256], index: 2, kind: output, shape index: {}]
  %s3 = sld [smem:[#allocation0]]
  $region41: #{positional_encoding_2d_add.1} parent=0
    _
  %s5 = ssub.s32 1, %s3
  %s6 = scalar_select 0, %s5, %s3
  loop: start=0, step=1, limit=4
  $region2: #{positional_encoding_2d_add.1} parent=0 // loop_pre_header
    _
  $region3: #{positional_encoding_2d_add.1} parent=0 // loop_header
    %s8 = sphi 0, %s12
    %p9 = scmp.ge.s32.totalorder %s8, 4
    %s15 = sphi 0, %s34
    %s16 = sphi 0, %s30
    %s17 = sphi 0, %s26
    %s18 = sphi 0, %s15
    %s19 = sphi 0, %s16
    %s20 = sphi 0, %s17
    %s21 = sphi 0, %s18
    %s22 = sphi 0, %s19
    %s23 = sphi 0, %s20
    %s41 = sphi 0, %s43
    %s44 = sphi 0, %s41
    %s45 = sphi 0, %s44
    %s61 = sphi 0, %s45
    %s69 = sphi 0, %s71
    %s72 = sphi 0, %s69
    %s73 = sphi 0, %s72
    %s89 = sphi 0, %s73
    %s99 = sphi 0, %s101
    %s102 = sphi 0, %s99
    %s103 = sphi 0, %s102
    %s119 = sphi 0, %s103
  $region4: #{positional_encoding_2d_add.1} parent=0 // loop_header_branch
    %11 = sbr.rel (%p9) target = $region8
  $region5: #{positional_encoding_2d_add.1} parent=0 // loop_body
    %s13 = ssub.s32 %s8, 1
    %s14 = ssub.s32 %s8, 2
    %s24 = sadd.s32 1, %s17
    %p25 = scmp.ge.s32.totalorder %s24, 2
    %s26 = scalar_select %p25, 0, %s24
    %s27 = sadd.s32 1, %s16
    %s28 = scalar_select %p25, %s27, %s16
    %p29 = scmp.ge.s32.totalorder %s28, 1
    %s30 = scalar_select %p29, 0, %s28
    %s31 = sadd.s32 1, %s15
    %s32 = scalar_select %p29, %s31, %s15
    %p33 = scmp.ge.s32.totalorder %s32, 1
    %s34 = scalar_select %p33, 0, %s32
    %s35 = ssub.s32 %s17, %s26
    %s36 = ssub.s32 %s15, %s34
    %s37 = sor.u32 %s35, %s36
    %s38 = ssub.s32 %s16, %s30
    %s39 = sor.u32 %s37, %s38
    %p40 = scmp.eq.s32.totalorder %s39, 0
    %s42 = sadd.s32 %s41, 1
    %s43 = scalar_select %p40, %s41, %s42
    %p46 = pneg %p40
    %p47 = scmp.eq.s32.totalorder %s8, 1
    %p48 = por %p46, %p47
    %p49 = scmp.ne.s32.totalorder %s41, %s44
    %p50 = scmp.eq.s32.totalorder %s8, 0
    %p51 = por %p49, %p50
    %p52 = scmp.ne.s32.totalorder %s41, %s44
    %p53 = scmp.eq.s32.totalorder %s13, 1
    %p54 = por %p52, %p53
    %p55 = scmp.ne.s32.totalorder %s44, %s45
    %p56 = scmp.eq.s32.totalorder %s13, 0
    %p57 = por %p55, %p56
    %p58 = scmp.ne.s32.totalorder %s44, %s45
    %p59 = scmp.eq.s32.totalorder %s14, 1
    %p60 = por %p58, %p59
    %p62 = scmp.ne.s32.totalorder %s45, %s61
    %p63 = scmp.eq.s32.totalorder %s14, 0
    %p64 = por %p62, %p63
    %s65 = ssub.s32 %s15, %s34
    %s66 = ssub.s32 %s16, %s30
    %s67 = sor.u32 %s65, %s66
    %p68 = scmp.eq.s32.totalorder %s67, 0
    %s70 = sadd.s32 %s69, 1
    %s71 = scalar_select %p68, %s69, %s70
    %p74 = pneg %p68
    %p75 = scmp.eq.s32.totalorder %s8, 1
    %p76 = por %p74, %p75
    %p77 = scmp.ne.s32.totalorder %s69, %s72
    %p78 = scmp.eq.s32.totalorder %s8, 0
    %p79 = por %p77, %p78
    %p80 = scmp.ne.s32.totalorder %s69, %s72
    %p81 = scmp.eq.s32.totalorder %s13, 1
    %p82 = por %p80, %p81
    %p83 = scmp.ne.s32.totalorder %s72, %s73
    %p84 = scmp.eq.s32.totalorder %s13, 0
    %p85 = por %p83, %p84
    %p86 = scmp.ne.s32.totalorder %s72, %s73
    %p87 = scmp.eq.s32.totalorder %s14, 1
    %p88 = por %p86, %p87
    %p90 = scmp.ne.s32.totalorder %s73, %s89
    %p91 = scmp.eq.s32.totalorder %s14, 0
    %p92 = por %p90, %p91
    %s93 = ssub.s32 %s17, %s26
    %s94 = ssub.s32 %s15, %s34
    %s95 = sor.u32 %s93, %s94
    %s96 = ssub.s32 %s16, %s30
    %s97 = sor.u32 %s95, %s96
    %p98 = scmp.eq.s32.totalorder %s97, 0
    %s100 = sadd.s32 %s99, 1
    %s101 = scalar_select %p98, %s99, %s100
    %p104 = pneg %p98
    %p105 = scmp.eq.s32.totalorder %s8, 1
    %p106 = por %p104, %p105
    %p107 = scmp.ne.s32.totalorder %s99, %s102
    %p108 = scmp.eq.s32.totalorder %s8, 0
    %p109 = por %p107, %p108
    %p110 = scmp.ne.s32.totalorder %s99, %s102
    %p111 = scmp.eq.s32.totalorder %s13, 1
    %p112 = por %p110, %p111
    %p113 = scmp.ne.s32.totalorder %s102, %s103
    %p114 = scmp.eq.s32.totalorder %s13, 0
    %p115 = por %p113, %p114
    %p116 = scmp.ne.s32.totalorder %s102, %s103
    %p117 = scmp.eq.s32.totalorder %s14, 1
    %p118 = por %p116, %p117
    %p120 = scmp.ne.s32.totalorder %s103, %s119
    %p121 = scmp.eq.s32.totalorder %s14, 0
    %p122 = por %p120, %p121
    %p123 = scmp.le.s32.totalorder 1, %s8
    %p124 = scmp.lt.s32.totalorder %s8, 3
    %p125 = pnand %p123, %p124
    %p126 = pneg %p125
    // Predicated region
    $region9: #{positional_encoding_2d_add.1} parent=5 // pred_check
      _
    $region10: #{positional_encoding_2d_add.1} parent=5 // pred_check_branch
      %128 = sbr.rel (%p125) target = $region12
    $region11: #{positional_encoding_2d_add.1} parent=5 // pred_region
      %s129 = ssub.s32 %s8, 1
      // Predicated region
      $region13: #{positional_encoding_2d_add.1} parent=11 // pred_check
        %p130 = pneg %p85
      $region14: #{positional_encoding_2d_add.1} parent=11 // pred_check_branch
        %132 = sbr.rel (%p130) target = $region16
      $region15: #{positional_encoding_2d_add.1} parent=11 // pred_region
        %s133 = smul.u32 2, %s19
        %p134 = scmp.lt.s32.totalorder %s18, 0
        %s135 = scalar_select %p134, %s18, 0
        %p136 = scmp.lt.s32.totalorder %s133, 1
        %s137 = scalar_select %p136, %s133, 1
        %s138 = smul.addr %s135, 2
        %s139 = sadd.s32 %s137, %s138
        %s140 = smul.addr %s139, 8
        %s141 = scalar_lea.vmem %s1, %s140
        %s142 = smul.u32 2, %s19
      $region16: #{positional_encoding_2d_add.1} parent=11 // pred_fallthru
        _
    $region12: #{positional_encoding_2d_add.1} parent=5 // pred_fallthru
      _
    %p143 = scmp.lt.s32.totalorder %s8, 2
    // Predicated region
    $region17: #{positional_encoding_2d_add.1} parent=5 // pred_check
      %p144 = pneg %p143
    $region18: #{positional_encoding_2d_add.1} parent=5 // pred_check_branch
      %146 = sbr.rel (%p144) target = $region20
    $region19: #{positional_encoding_2d_add.1} parent=5 // pred_region
      // Predicated region
      $region21: #{positional_encoding_2d_add.1} parent=19 // pred_check
        %p147 = pneg %p51
      $region22: #{positional_encoding_2d_add.1} parent=19 // pred_check_branch
        %149 = sbr.rel (%p147) target = $region24
      $region23: #{positional_encoding_2d_add.1} parent=19 // pred_region
        %s150 = smul.u32 2, %s16
        %p151 = scmp.lt.s32.totalorder %s17, 1
        %s152 = scalar_select %p151, %s17, 1
        %p153 = scmp.lt.s32.totalorder %s15, 0
        %s154 = scalar_select %p153, %s15, 0
        %p155 = scmp.lt.s32.totalorder %s150, 1
        %s156 = scalar_select %p155, %s150, 1
        %s157 = smul.addr %s154, 2
        %s158 = sadd.s32 %s156, %s157
        %s159 = smul.addr %s152, 2
        %s160 = sadd.s32 %s158, %s159
        %s161 = smul.addr %s160, 8
        %s162 = scalar_lea.vmem %s0, %s161
        %s163 = smul.u32 2, %s16
      $region24: #{positional_encoding_2d_add.1} parent=19 // pred_fallthru
        _
    $region20: #{positional_encoding_2d_add.1} parent=5 // pred_fallthru
      _
    %p164 = scmp.le.s32.totalorder 1, %s8
    %p165 = scmp.lt.s32.totalorder %s8, 3
    %p166 = pnand %p164, %p165
    %p167 = pneg %p166
    // Predicated region
    $region25: #{positional_encoding_2d_add.1} parent=5 // pred_check
      _
    $region26: #{positional_encoding_2d_add.1} parent=5 // pred_check_branch
      %169 = sbr.rel (%p166) target = $region28
    $region27: #{positional_encoding_2d_add.1} parent=5 // pred_region
      %s170 = ssub.s32 %s8, 1
      %s171 = smul.u32 2, %s19
      %p172 = scmp.lt.s32.totalorder %s20, 1
      %s173 = scalar_select %p172, %s20, 1
      %p174 = scmp.lt.s32.totalorder %s18, 0
      %s175 = scalar_select %p174, %s18, 0
      %p176 = scmp.lt.s32.totalorder %s171, 1
      %s177 = scalar_select %p176, %s171, 1
      %s178 = smul.addr %s175, 2
      %s179 = sadd.s32 %s177, %s178
      %s180 = smul.addr %s173, 2
      %s181 = sadd.s32 %s179, %s180
      %s182 = smul.addr %s181, 8
      %s183 = scalar_lea.vmem %s0, %s182
      %p184 = pneg %p57
      %p185 = pneg %p54
      %s186 = smul.u32 2, %s19
      %p187 = scmp.lt.s32.totalorder %s18, 0
      %s188 = scalar_select %p187, %s18, 0
      %p189 = scmp.lt.s32.totalorder %s186, 1
      %s190 = scalar_select %p189, %s186, 1
      %s191 = smul.addr %s188, 2
      %s192 = sadd.s32 %s190, %s191
      %s193 = smul.addr %s192, 8
      %s194 = scalar_lea.vmem %s1, %s193
      %p195 = pneg %p85
      %p196 = pneg %p82
      %p197 = pneg %p115
      %p198 = pneg %p112
      %s199 = smul.u32 2, %s19
      %p200 = scmp.lt.s32.totalorder %s20, 1
      %s201 = scalar_select %p200, %s20, 1
      %p202 = scmp.lt.s32.totalorder %s18, 0
      %s203 = scalar_select %p202, %s18, 0
      %p204 = scmp.lt.s32.totalorder %s199, 1
      %s205 = scalar_select %p204, %s199, 1
      %s206 = smul.addr %s203, 2
      %s207 = sadd.s32 %s205, %s206
      %s208 = smul.addr %s201, 2
      %s209 = sadd.s32 %s207, %s208
      %s210 = smul.addr %s209, 8
      %s211 = scalar_lea.vmem %s2, %s210
      %s212 = smul.u32 2, %s19
      %p213 = scmp.lt.s32.totalorder %s20, 1
      %s214 = scalar_select %p213, %s20, 1
      %p215 = scmp.lt.s32.totalorder %s18, 0
      %s216 = scalar_select %p215, %s18, 0
      %p217 = scmp.lt.s32.totalorder %s212, 1
      %s218 = scalar_select %p217, %s212, 1
      %s219 = smul.addr %s216, 2
      %s220 = sadd.s32 %s218, %s219
      %s221 = smul.addr %s214, 2
      %s222 = sadd.s32 %s220, %s221
      %s223 = smul.addr %s222, 8
      %s224 = scalar_lea.vmem %s0, %s223
      %s225 = smul.u32 2, %s19
      %s226 = smul.u32 2, %s19
      %p227 = scmp.lt.s32.totalorder %s18, 0
      %s228 = scalar_select %p227, %s18, 0
      %p229 = scmp.lt.s32.totalorder %s226, 1
      %s230 = scalar_select %p229, %s226, 1
      %s231 = smul.addr %s228, 2
      %s232 = sadd.s32 %s230, %s231
      %s233 = smul.addr %s232, 8
      %s234 = scalar_lea.vmem %s1, %s233
      %s235 = smul.u32 2, %s19
      %s236 = smul.u32 2, %s19
      %p237 = scmp.lt.s32.totalorder %s20, 1
      %s238 = scalar_select %p237, %s20, 1
      %p239 = scmp.lt.s32.totalorder %s18, 0
      %s240 = scalar_select %p239, %s18, 0
      %p241 = scmp.lt.s32.totalorder %s236, 1
      %s242 = scalar_select %p241, %s236, 1
      %s243 = smul.addr %s240, 2
      %s244 = sadd.s32 %s242, %s243
      %s245 = smul.addr %s238, 2
      %s246 = sadd.s32 %s244, %s245
      %s247 = smul.addr %s246, 8
      %s248 = scalar_lea.vmem %s2, %s247
      %s249 = smul.u32 2, %s19
      %v250 = vld [vmem:[%s224] sm:$0xff]
      %v251 = vld [vmem:[%s224 + $0x8] sm:$0xff]
      %v252 = vld [vmem:[%s234] sm:$0xff]
      %v253 = vld [vmem:[%s234 + $0x8] sm:$0xff]
      %v254 = vadd.f32 %v250, %v252
      %v255 = vadd.f32 %v251, %v253
      %256 = vst [vmem:[%s248] sm:$0xff] %v254
      %257 = vst [vmem:[%s248 + $0x8] sm:$0xff] %v255
      %s258 = smul.u32 2, %s19
      %p259 = scmp.lt.s32.totalorder %s20, 1
      %s260 = scalar_select %p259, %s20, 1
      %p261 = scmp.lt.s32.totalorder %s18, 0
      %s262 = scalar_select %p261, %s18, 0
      %p263 = scmp.lt.s32.totalorder %s258, 1
      %s264 = scalar_select %p263, %s258, 1
      %s265 = smul.addr %s262, 2
      %s266 = sadd.s32 %s264, %s265
      %s267 = smul.addr %s260, 2
      %s268 = sadd.s32 %s266, %s267
      %s269 = smul.addr %s268, 8
      %s270 = scalar_lea.vmem %s2, %s269
      // Predicated region
      $region29: #{positional_encoding_2d_add.1} parent=27 // pred_check
        %p271 = pneg %p112
      $region30: #{positional_encoding_2d_add.1} parent=27 // pred_check_branch
        %273 = sbr.rel (%p271) target = $region32
      $region31: #{positional_encoding_2d_add.1} parent=27 // pred_region
        %s274 = smul.u32 2, %s19
      $region32: #{positional_encoding_2d_add.1} parent=27 // pred_fallthru
        _
    $region28: #{positional_encoding_2d_add.1} parent=5 // pred_fallthru
      _
    %p275 = scmp.le.s32.totalorder 2, %s8
    // Predicated region
    $region33: #{positional_encoding_2d_add.1} parent=5 // pred_check
      %p276 = pneg %p275
    $region34: #{positional_encoding_2d_add.1} parent=5 // pred_check_branch
      %278 = sbr.rel (%p276) target = $region36
    $region35: #{positional_encoding_2d_add.1} parent=5 // pred_region
      %s279 = ssub.s32 %s8, 2
      // Predicated region
      $region37: #{positional_encoding_2d_add.1} parent=35 // pred_check
        %p280 = pneg %p118
      $region38: #{positional_encoding_2d_add.1} parent=35 // pred_check_branch
        %282 = sbr.rel (%p280) target = $region40
      $region39: #{positional_encoding_2d_add.1} parent=35 // pred_region
        %s283 = smul.u32 2, %s22
        %p284 = scmp.lt.s32.totalorder %s23, 1
        %s285 = scalar_select %p284, %s23, 1
        %p286 = scmp.lt.s32.totalorder %s21, 0
        %s287 = scalar_select %p286, %s21, 0
        %p288 = scmp.lt.s32.totalorder %s283, 1
        %s289 = scalar_select %p288, %s283, 1
        %s290 = smul.addr %s287, 2
        %s291 = sadd.s32 %s289, %s290
        %s292 = smul.addr %s285, 2
        %s293 = sadd.s32 %s291, %s292
        %s294 = smul.addr %s293, 8
        %s295 = scalar_lea.vmem %s2, %s294
      $region40: #{positional_encoding_2d_add.1} parent=35 // pred_fallthru
        _
    $region36: #{positional_encoding_2d_add.1} parent=5 // pred_fallthru
      _
  $region6: #{positional_encoding_2d_add.1} parent=0 // loop_footer
    %s12 = sadd.s32 1, %s8
  $region7: #{positional_encoding_2d_add.1} parent=0 // loop_footer_branch
    %7 = sbr.rel target = $region3
  $region8: #{positional_encoding_2d_add.1} parent=0 // loop_exit
    _

</llo_original>
